<compile_context>
chip_gen: v6e
topology: v6e:2x2x1
jax: 0.10.0
libtpu: 0.0.40
codegen_flags: <defaults>
</compile_context>

<pallas_src>
import functools

import jax
import jax.numpy as jnp
from jax import lax
from jax.experimental import pallas as pl
from jax.experimental.pallas import tpu as pltpu


# ---------------------------------------------------------------------------
# Helpers
# ---------------------------------------------------------------------------
def _device_kind() -> str:
    try:
        return jax.devices()[0].device_kind.lower()
    except Exception:
        return ""


def _use_int8_mxu() -> bool:
    """v4/v5e/v6e have a native int8 MXU path; v7x is fp8/bf16 only."""
    k = _device_kind()
    return not ("v7" in k or "7x" in k)


def _pick_tile(dim, candidates):
    for c in candidates:
        if dim >= c and dim % c == 0:
            return c
    return dim  # fall back to the full dimension (always a legal block)


def _round_up(a, b):
    return (a + b - 1) // b * b


def _make_group_metadata(starts, ends, m_padded, tile_m, num_groups):
    """Per-work-item metadata for the grouped matmul.

    Work items are ordered tile-major: every m-tile gets one work item per group
    overlapping it (>= 1, so uncovered tiles are zero-filled). Boundary tiles are
    therefore visited by consecutive work items, which is required so the output
    VMEM block persists between the masked blends.
    """
    m_tiles = m_padded // tile_m
    max_work = m_tiles + num_groups - 1  # provable worst case

    tile_idx = jnp.arange(m_tiles, dtype=jnp.int32)
    tile_lo = tile_idx * tile_m
    tile_hi = tile_lo + tile_m

    # Group intervals are a sorted partition of rows -> searchsorted gives the
    # first / last group overlapping each tile window.
    g_lo = jnp.searchsorted(ends, tile_lo, side="right").astype(jnp.int32)
    g_hi = (jnp.searchsorted(starts, tile_hi, side="left") - 1).astype(jnp.int32)
    visits = jnp.maximum(g_hi - g_lo + 1, 1)            # >=1: uncovered tiles get zeroed

    cum = jnp.cumsum(visits)
    total = cum[-1]
    offs = cum - visits

    t = jnp.arange(max_work, dtype=jnp.int32)
    valid = t < total
    # Padding items map to the LAST tile (consecutive with its real visits) with an
    # empty row range, so they neither compute nor disturb the pipelined output block.
    tile_of_t = jnp.minimum(
        jnp.searchsorted(cum, t, side="right").astype(jnp.int32), m_tiles - 1)
    grp_of_t = jnp.clip(g_lo[tile_of_t] + (t - offs[tile_of_t]), 0, num_groups - 1)

    base = tile_of_t * tile_m
    row_lo = jnp.clip(starts[grp_of_t] - base, 0, tile_m)
    row_hi = jnp.clip(ends[grp_of_t] - base, 0, tile_m)
    row_lo = jnp.where(valid, row_lo, 0).astype(jnp.int32)
    row_hi = jnp.where(valid, row_hi, 0).astype(jnp.int32)
    first = (valid & (t == offs[tile_of_t])).astype(jnp.int32)
    valid = valid.astype(jnp.int32)

    return tile_of_t, grp_of_t, row_lo, row_hi, first, valid, max_work


# ---------------------------------------------------------------------------
# Kernel
# ---------------------------------------------------------------------------
def _quant_gmm_kernel(tid_ref, gid_ref, lo_ref, hi_ref, first_ref, valid_ref,  # SMEM prefetch
                      x_ref, w_ref, scale_ref, pts_ref,                        # VMEM inputs
                      out_ref,                                                 # VMEM output
                      acc_ref,                                                 # scratch (tm, tn)
                      *, use_int8_mxu):
    del tid_ref, gid_ref  # only used inside the index maps
    t = pl.program_id(1)
    k = pl.program_id(2)
    nk = pl.num_programs(2)

    lo = lo_ref[t]
    hi = hi_ref[t]

    @pl.when(k == 0)
    def _zero_acc():
        acc_ref[...] = jnp.zeros_like(acc_ref)

    # Skip MXU work for empty groups / padding work items.
    @pl.when(hi > lo)
    def _accumulate():
        if use_int8_mxu:
            # Native int8 x int8 -> int32 MXU path; accumulate in int32 (bit-exact).
            acc_ref[...] += jnp.dot(x_ref[...], w_ref[...],
                                    preferred_element_type=jnp.int32)
        else:
            # v7x MXU has no integer datapath; int8 values (and their products,
            # accumulated in f32) are exact in the bf16 MXU path.
            acc_ref[...] += jnp.dot(x_ref[...].astype(jnp.bfloat16),
                                    w_ref[...].astype(jnp.bfloat16),
                                    preferred_element_type=jnp.float32)

    @pl.when(jnp.logical_and(k == nk - 1, valid_ref[t] == 1))
    def _epilogue():
        # Dequantize: per-output-channel (this group) and per-token scales.
        y = acc_ref[...].astype(jnp.float32) * scale_ref[...] * pts_ref[...]
        tm = out_ref.shape[0]
        first = first_ref[t]
        full = jnp.logical_and(first == 1, jnp.logical_and(lo == 0, hi == tm))

        @pl.when(full)
        def _interior_store():
            # Fast path (vast majority of tiles): one unmasked lane-dense store.
            out_ref[...] = y.astype(out_ref.dtype)

        @pl.when(jnp.logical_not(full))
        def _boundary_store():
            rows = lax.broadcasted_iota(jnp.int32, (tm, 1), 0)
            mask = (rows >= lo) & (rows < hi)

            @pl.when(first == 1)
            def _first_visit():
                # First visit of a boundary / uncovered tile: zero outside range.
                out_ref[...] = jnp.where(mask, y, 0.0).astype(out_ref.dtype)

            @pl.when(first == 0)
            def _later_visit():
                # Boundary tile revisited by the next group (consecutive work item,
                # same resident output block): blend only this group's rows.
                out_ref[...] = jnp.where(mask, y.astype(out_ref.dtype), out_ref[...])


# ---------------------------------------------------------------------------
# Wrapper
# ---------------------------------------------------------------------------
def quant_gmm(x, weight, scale, per_token_scale, group_list,
              group_list_type=0, output_dtype=jnp.bfloat16,
              tile_m=None, tile_n=None, tile_k=None):
    """Pallas implementation of npu_quant_gmm (type 0) / npu_quant_gmm_v2 (type 1)."""
    M, K = x.shape
    G, Kw, N = weight.shape
    assert Kw == K and scale.shape == (G, N) and per_token_scale.shape == (M,)

    group_list = jnp.asarray(group_list, jnp.int32)
    if group_list_type == 0:          # cumulative offsets
        ends = group_list
        starts = jnp.concatenate([jnp.zeros((1,), jnp.int32), group_list[:-1]])
    elif group_list_type == 1:        # per-group counts
        ends = jnp.cumsum(group_list).astype(jnp.int32)
        starts = ends - group_list
    else:
        raise ValueError("group_list_type must be 0 or 1")

    use_i8 = _use_int8_mxu()

    # --- tile sizes (sized to balance DMA vs MXU; ~10-13 MiB double-buffered) ---
    if tile_m is None:
        tile_m = min(512, _round_up(M, 8))
    if tile_k is None:
        tile_k = K if K <= 2048 else _pick_tile(K, (2048, 1024, 512, 256, 128))
    if tile_n is None:
        tile_n = _pick_tile(N, (1024, 512, 256, 128))
        # v7x has 2 TensorCores: keep the "parallel" n axis at extent >= 2.
        if (not use_i8) and N // tile_n < 2 and N % 256 == 0 and N >= 256:
            tile_n = max(128, tile_n // 2)
    assert K % tile_k == 0, "tile_k must divide K"
    assert N % tile_n == 0, "tile_n must divide N"
    assert tile_m % 8 == 0 or tile_m == M, "tile_m must be a multiple of 8"

    m_padded = _round_up(M, tile_m)
    if m_padded != M:
        x = jnp.pad(x, ((0, m_padded - M), (0, 0)))
        per_token_scale = jnp.pad(per_token_scale, (0, m_padded - M))
    starts = jnp.clip(starts, 0, m_padded)
    ends = jnp.clip(ends, 0, m_padded)

    pts = per_token_scale.reshape(m_padded, 1).astype(jnp.float32)
    scale3 = scale.reshape(G, 1, N).astype(jnp.float32)

    (tile_ids, grp_ids, row_lo, row_hi, first, valid,
     max_work) = _make_group_metadata(starts, ends, m_padded, tile_m, G)

    n_tiles = N // tile_n
    k_tiles = K // tile_k
    acc_dtype = jnp.int32 if use_i8 else jnp.float32

    kernel = functools.partial(_quant_gmm_kernel, use_int8_mxu=use_i8)

    # Index maps (scalar-prefetch refs passed positionally). Padding items multiply
    # the k block index by valid==0 so their block indices freeze -> no re-DMA.
    x_map = lambda n, t, k, tid, gid, lo, hi, fst, vld: (tid[t], k * vld[t])
    w_map = lambda n, t, k, tid, gid, lo, hi, fst, vld: (gid[t], k * vld[t], n)
    s_map = lambda n, t, k, tid, gid, lo, hi, fst, vld: (gid[t], 0, n)
    p_map = lambda n, t, k, tid, gid, lo, hi, fst, vld: (tid[t], 0)
    o_map = lambda n, t, k, tid, gid, lo, hi, fst, vld: (tid[t], n)

    grid_spec = pltpu.PrefetchScalarGridSpec(
        num_scalar_prefetch=6,
        grid=(n_tiles, max_work, k_tiles),
        in_specs=[
            pl.BlockSpec((tile_m, tile_k), x_map),            # x tile
            pl.BlockSpec((None, tile_k, tile_n), w_map),      # weight[g] (squeezed)
            pl.BlockSpec((None, 1, tile_n), s_map),           # scale[g]  (squeezed)
            pl.BlockSpec((tile_m, 1), p_map),                 # per-token scale
        ],
        out_specs=pl.BlockSpec((tile_m, tile_n), o_map),
        scratch_shapes=[pltpu.VMEM((tile_m, tile_n), acc_dtype)],
    )

    out = pl.pallas_call(
        kernel,
        out_shape=jax.ShapeDtypeStruct((m_padded, N), output_dtype),
        grid_spec=grid_spec,
        compiler_params=pltpu.CompilerParams(
            # n-tiles are independent (megacore-shardable); the work axis revisits
            # boundary output tiles and K is a reduction -> both "arbitrary".
            dimension_semantics=("parallel", "arbitrary", "arbitrary"),
            vmem_limit_bytes=48 * 1024 * 1024),
    )(tile_ids, grp_ids, row_lo, row_hi, first, valid, x, weight, scale3, pts)

    return out[:M] if m_padded != M else out


# ---------------------------------------------------------------------------
# Pure-JAX reference (same math, no Pallas)
# ---------------------------------------------------------------------------
def quant_gmm_reference(x, weight, scale, per_token_scale, group_list,
                        group_list_type, output_dtype):
    M, K = x.shape
    G, _, N = weight.shape
    gl = jnp.asarray(group_list, jnp.int32)
    if group_list_type == 0:
        ends = gl
        starts = jnp.concatenate([jnp.zeros((1,), jnp.int32), gl[:-1]])
    else:
        ends = jnp.cumsum(gl).astype(jnp.int32)
        starts = ends - gl
    out = jnp.zeros((M, N), jnp.float32)
    rows = jnp.arange(M)[:, None]
    for g in range(G):
        acc = jnp.dot(x.astype(jnp.int32), weight[g].astype(jnp.int32)).astype(jnp.float32)
        y = acc * scale[g][None, :].astype(jnp.float32) * per_token_scale[:, None].astype(jnp.float32)
        mask = (rows >= starts[g]) & (rows < ends[g])
        out = jnp.where(mask, y, out)
    return out.astype(output_dtype)


class QuantGMMModel:
    """Mirror of the PyTorch QuantGMMModel.forward dispatch."""

    def __call__(self, x, weight, scale, per_token_scale, group_list,
                 group_list_type, output_dtype):
        if group_list_type in (0, 1):
            return quant_gmm(x, weight, scale, per_token_scale, group_list,
                             group_list_type=group_list_type, output_dtype=output_dtype)
        raise ValueError("unsupported group_list_type")


if __name__ == "__main__":
    key = jax.random.PRNGKey(0)
    k_x, k_w, k_s, k_p = jax.random.split(key, 4)

    # Small shapes: M tokens, K hidden-in, N hidden-out, G expert groups.
    M, K, N, G = 32, 64, 128, 4

    x = jax.random.randint(k_x, (M, K), -8, 8, dtype=jnp.int8)
    weight = jax.random.randint(k_w, (G, K, N), -8, 8, dtype=jnp.int8)
    scale = jax.random.uniform(k_s, (G, N), jnp.float32, 0.01, 0.02)
    per_token_scale = jax.random.uniform(k_p, (M,), jnp.float32, 0.5, 1.5)

    # group_list_type = 0: cumulative offsets (last entry == M).
    group_list_cum = jnp.array([5, 12, 20, 32], dtype=jnp.int32)
    # group_list_type = 1: per-group counts, including an empty group.
    group_list_empty = jnp.array([5, 0, 15, 12], dtype=jnp.int32)
    # Tile-aligned boundaries (with tile_m=8): exercises padding work items.
    group_list_aligned = jnp.array([8, 16, 24, 32], dtype=jnp.int32)

    model = QuantGMMModel()
    out_dtype = jnp.bfloat16

    def check(y, r, name):
        assert y.shape == (M, N) and y.dtype == out_dtype, name
        assert jnp.allclose(y.astype(jnp.float32), r.astype(jnp.float32),
                            rtol=2e-2, atol=2e-2), name

    r0 = quant_gmm_reference(x, weight, scale, per_token_scale, group_list_cum, 0, out_dtype)
    r2 = quant_gmm_reference(x, weight, scale, per_token_scale, group_list_empty, 1, out_dtype)
    r3 = quant_gmm_reference(x, weight, scale, per_token_scale, group_list_aligned, 0, out_dtype)

    # Default tiles (single m-tile at this size): type 0 and type 1 (empty group).
    y0 = jax.block_until_ready(
        model(x, weight, scale, per_token_scale, group_list_cum, 0, out_dtype))
    check(y0, r0, "type0")
    y2 = jax.block_until_ready(
        model(x, weight, scale, per_token_scale, group_list_empty, 1, out_dtype))
    check(y2, r2, "type1-empty-group")

    # Multi-m-tile path: group boundaries straddle tiles -> boundary blends,
    # first-visit zero fill.
    yb = jax.block_until_ready(
        quant_gmm(x, weight, scale, per_token_scale, group_list_cum,
                  group_list_type=0, output_dtype=out_dtype, tile_m=8))
    check(yb, r0, "type0-tile_m=8")

    # Tile-aligned groups with tile_m=8 -> padding work items (frozen index maps).
    yp = jax.block_until_ready(
        quant_gmm(x, weight, scale, per_token_scale, group_list_aligned,
                  group_list_type=0, output_dtype=out_dtype, tile_m=8))
    check(yp, r3, "type0-aligned-padding")

    print("KERNEL_OK")
</pallas_src>

<mosaic_0001>
module attributes {stable_mosaic.version = 11 : i64} {
  func.func @_quant_gmm_kernel(%arg0: i32, %arg1: i32, %arg2: i32, %arg3: memref<4xi32, #tpu.memory_space<smem>>, %arg4: memref<4xi32, #tpu.memory_space<smem>>, %arg5: memref<4xi32, #tpu.memory_space<smem>>, %arg6: memref<4xi32, #tpu.memory_space<smem>>, %arg7: memref<4xi32, #tpu.memory_space<smem>>, %arg8: memref<4xi32, #tpu.memory_space<smem>>, %arg9: memref<32x64xi8, #tpu.memory_space<vmem>>, %arg10: memref<1x64x128xi8, #tpu.memory_space<vmem>>, %arg11: memref<1x1x128xf32, #tpu.memory_space<vmem>>, %arg12: memref<32x1xf32, #tpu.memory_space<vmem>>, %arg13: memref<32x128xbf16, #tpu.memory_space<vmem>>, %arg14: memref<32x128xi32, #tpu.memory_space<vmem>>) attributes {dimension_semantics = [#tpu.dimension_semantics<parallel>, #tpu.dimension_semantics<arbitrary>, #tpu.dimension_semantics<arbitrary>], iteration_bounds = array<i64: 1, 4, 1>, scalar_prefetch = 6 : i64, scratch_operands = 1 : i64, tpu.core_type = #tpu.core_type<tc>, window_params = [{transform_indices = @transform_0, window_bounds = array<i64: 32, 64>}, {transform_indices = @transform_1, window_bounds = array<i64: 1, 64, 128>}, {transform_indices = @transform_2, window_bounds = array<i64: 1, 1, 128>}, {transform_indices = @transform_3, window_bounds = array<i64: 32, 1>}, {transform_indices = @transform_4, window_bounds = array<i64: 32, 128>}]} {
    %0 = arith.index_cast %arg1 : i32 to index
    %1 = memref.load %arg5[%0] : memref<4xi32, #tpu.memory_space<smem>>
    %2 = arith.index_cast %arg1 : i32 to index
    %3 = memref.load %arg6[%2] : memref<4xi32, #tpu.memory_space<smem>>
    %c0_i32 = arith.constant 0 : i32
    %4 = arith.cmpi eq, %arg2, %c0_i32 : i32
    %5 = arith.extui %4 : i1 to i32
    %c0_i32_0 = arith.constant 0 : i32
    %6 = arith.cmpi ne, %5, %c0_i32_0 : i32
    scf.if %6 {
      %c0_i32_4 = arith.constant 0 : i32
      %17 = vector.broadcast %c0_i32_4 : i32 to vector<32x128xi32>
      %c0 = arith.constant 0 : index
      %c0_5 = arith.constant 0 : index
      %18 = vector.load %arg14[%c0, %c0_5] : memref<32x128xi32, #tpu.memory_space<vmem>>, vector<32x128xi32>
      tpu.vector_store %arg14[%c0, %c0_5], %17 {strides = array<i32>} : memref<32x128xi32, #tpu.memory_space<vmem>>, vector<32x128xi32>,
    } else {
    }
    %7 = arith.cmpi sgt, %3, %1 : i32
    %8 = arith.extui %7 : i1 to i32
    %c0_i32_1 = arith.constant 0 : i32
    %9 = arith.cmpi ne, %8, %c0_i32_1 : i32
    scf.if %9 {
      %c0 = arith.constant 0 : index
      %c0_4 = arith.constant 0 : index
      %17 = vector.load %arg14[%c0, %c0_4] : memref<32x128xi32, #tpu.memory_space<vmem>>, vector<32x128xi32>
      %c0_5 = arith.constant 0 : index
      %c0_6 = arith.constant 0 : index
      %18 = vector.load %arg9[%c0_5, %c0_6] : memref<32x64xi8, #tpu.memory_space<vmem>>, vector<32x64xi8>
      %c0_7 = arith.constant 0 : index
      %c0_8 = arith.constant 0 : index
      %c0_9 = arith.constant 0 : index
      %19 = vector.load %arg10[%c0_7, %c0_8, %c0_9] : memref<1x64x128xi8, #tpu.memory_space<vmem>>, vector<1x64x128xi8>
      %20 = vector.shape_cast %19 : vector<1x64x128xi8> to vector<64x128xi8>
      %cst = arith.constant dense<0> : vector<32x128xi32>
      %21 = tpu.matmul %18, %20, %cst {dimension_numbers = #tpu.dot_dimension_numbers<[1], [0], [0], [1], [0, 0, 1, 1], [], []>} : vector<32x64xi8>, vector<64x128xi8>, vector<32x128xi32> -> vector<32x128xi32>
      %22 = arith.addi %17, %21 : vector<32x128xi32>
      %c0_10 = arith.constant 0 : index
      %c0_11 = arith.constant 0 : index
      %23 = vector.load %arg14[%c0_10, %c0_11] : memref<32x128xi32, #tpu.memory_space<vmem>>, vector<32x128xi32>
      tpu.vector_store %arg14[%c0_10, %c0_11], %22 {strides = array<i32>} : memref<32x128xi32, #tpu.memory_space<vmem>>, vector<32x128xi32>,
    } else {
    }
    %c0_i32_2 = arith.constant 0 : i32
    %10 = arith.cmpi eq, %arg2, %c0_i32_2 : i32
    %11 = arith.index_cast %arg1 : i32 to index
    %12 = memref.load %arg8[%11] : memref<4xi32, #tpu.memory_space<smem>>
    %c1_i32 = arith.constant 1 : i32
    %13 = arith.cmpi eq, %12, %c1_i32 : i32
    %14 = arith.andi %10, %13 : i1
    %15 = arith.extui %14 : i1 to i32
    %c0_i32_3 = arith.constant 0 : i32
    %16 = arith.cmpi ne, %15, %c0_i32_3 : i32
    scf.if %16 {
      %c0 = arith.constant 0 : index
      %c0_4 = arith.constant 0 : index
      %17 = vector.load %arg14[%c0, %c0_4] : memref<32x128xi32, #tpu.memory_space<vmem>>, vector<32x128xi32>
      %18 = arith.sitofp %17 : vector<32x128xi32> to vector<32x128xf32>
      %c0_5 = arith.constant 0 : index
      %c0_6 = arith.constant 0 : index
      %c0_7 = arith.constant 0 : index
      %19 = vector.load %arg11[%c0_5, %c0_6, %c0_7] : memref<1x1x128xf32, #tpu.memory_space<vmem>>, vector<1x1x128xf32>
      %20 = vector.shape_cast %19 : vector<1x1x128xf32> to vector<1x128xf32>
      %21 = vector.broadcast %20 : vector<1x128xf32> to vector<32x128xf32>
      %22 = arith.mulf %18, %21 : vector<32x128xf32>
      %c0_8 = arith.constant 0 : index
      %c0_9 = arith.constant 0 : index
      %23 = vector.load %arg12[%c0_8, %c0_9] : memref<32x1xf32, #tpu.memory_space<vmem>>, vector<32x1xf32>
      %24 = vector.broadcast %23 : vector<32x1xf32> to vector<32x128xf32>
      %25 = arith.mulf %22, %24 : vector<32x128xf32>
      %26 = arith.index_cast %arg1 : i32 to index
      %27 = memref.load %arg7[%26] : memref<4xi32, #tpu.memory_space<smem>>
      %c1_i32_10 = arith.constant 1 : i32
      %28 = arith.cmpi eq, %27, %c1_i32_10 : i32
      %c0_i32_11 = arith.constant 0 : i32
      %29 = arith.cmpi eq, %1, %c0_i32_11 : i32
      %c32_i32 = arith.constant 32 : i32
      %30 = arith.cmpi eq, %3, %c32_i32 : i32
      %31 = arith.andi %29, %30 : i1
      %32 = arith.andi %28, %31 : i1
      %33 = arith.extui %32 : i1 to i32
      %c0_i32_12 = arith.constant 0 : i32
      %34 = arith.cmpi ne, %33, %c0_i32_12 : i32
      scf.if %34 {
        %38 = arith.truncf %25 : vector<32x128xf32> to vector<32x128xbf16>
        %c0_14 = arith.constant 0 : index
        %c0_15 = arith.constant 0 : index
        %39 = vector.load %arg13[%c0_14, %c0_15] : memref<32x128xbf16, #tpu.memory_space<vmem>>, vector<32x128xbf16>
        tpu.vector_store %arg13[%c0_14, %c0_15], %38 {strides = array<i32>} : memref<32x128xbf16, #tpu.memory_space<vmem>>, vector<32x128xbf16>,
      } else {
      }
      %true = arith.constant true
      %35 = arith.xori %32, %true : i1
      %36 = arith.extui %35 : i1 to i32
      %c0_i32_13 = arith.constant 0 : i32
      %37 = arith.cmpi ne, %36, %c0_i32_13 : i32
      scf.if %37 {
        %38 = tpu.iota {dimensions = array<i32: 0>} : vector<32x1xi32>
        %39 = vector.broadcast %1 : i32 to vector<32x1xi32>
        %40 = arith.cmpi sge, %38, %39 : vector<32x1xi32>
        %41 = vector.broadcast %3 : i32 to vector<32x1xi32>
        %42 = arith.cmpi slt, %38, %41 : vector<32x1xi32>
        %43 = arith.andi %40, %42 : vector<32x1xi1>
        %c1_i32_14 = arith.constant 1 : i32
        %44 = arith.cmpi eq, %27, %c1_i32_14 : i32
        %45 = arith.extui %44 : i1 to i32
        %c0_i32_15 = arith.constant 0 : i32
        %46 = arith.cmpi ne, %45, %c0_i32_15 : i32
        scf.if %46 {
          %cst = arith.constant 0.000000e+00 : f32
          %50 = vector.shape_cast %43 : vector<32x1xi1> to vector<32x1xi1>
          %51 = vector.broadcast %50 : vector<32x1xi1> to vector<32x128xi1>
          %52 = vector.broadcast %cst : f32 to vector<32x128xf32>
          %53 = arith.select %51, %25, %52 : vector<32x128xi1>, vector<32x128xf32>
          %54 = arith.truncf %53 : vector<32x128xf32> to vector<32x128xbf16>
          %c0_18 = arith.constant 0 : index
          %c0_19 = arith.constant 0 : index
          %55 = vector.load %arg13[%c0_18, %c0_19] : memref<32x128xbf16, #tpu.memory_space<vmem>>, vector<32x128xbf16>
          tpu.vector_store %arg13[%c0_18, %c0_19], %54 {strides = array<i32>} : memref<32x128xbf16, #tpu.memory_space<vmem>>, vector<32x128xbf16>,
        } else {
        }
        %c0_i32_16 = arith.constant 0 : i32
        %47 = arith.cmpi eq, %27, %c0_i32_16 : i32
        %48 = arith.extui %47 : i1 to i32
        %c0_i32_17 = arith.constant 0 : i32
        %49 = arith.cmpi ne, %48, %c0_i32_17 : i32
        scf.if %49 {
          %50 = arith.truncf %25 : vector<32x128xf32> to vector<32x128xbf16>
          %c0_18 = arith.constant 0 : index
          %c0_19 = arith.constant 0 : index
          %51 = vector.load %arg13[%c0_18, %c0_19] : memref<32x128xbf16, #tpu.memory_space<vmem>>, vector<32x128xbf16>
          %52 = vector.shape_cast %43 : vector<32x1xi1> to vector<32x1xi1>
          %53 = vector.broadcast %52 : vector<32x1xi1> to vector<32x128xi1>
          %54 = arith.select %53, %50, %51 : vector<32x128xi1>, vector<32x128xbf16>
          %c0_20 = arith.constant 0 : index
          %c0_21 = arith.constant 0 : index
          %55 = vector.load %arg13[%c0_20, %c0_21] : memref<32x128xbf16, #tpu.memory_space<vmem>>, vector<32x128xbf16>
          tpu.vector_store %arg13[%c0_20, %c0_21], %54 {strides = array<i32>} : memref<32x128xbf16, #tpu.memory_space<vmem>>, vector<32x128xbf16>,
        } else {
        }
      } else {
      }
    } else {
    }
    return
  }
  func.func @transform_0(%arg0: i32, %arg1: i32, %arg2: i32, %arg3: memref<4xi32, #tpu.memory_space<smem>>, %arg4: memref<4xi32, #tpu.memory_space<smem>>, %arg5: memref<4xi32, #tpu.memory_space<smem>>, %arg6: memref<4xi32, #tpu.memory_space<smem>>, %arg7: memref<4xi32, #tpu.memory_space<smem>>, %arg8: memref<4xi32, #tpu.memory_space<smem>>) -> (i32, i32) {
    %0 = arith.index_cast %arg1 : i32 to index
    %1 = memref.load %arg3[%0] : memref<4xi32, #tpu.memory_space<smem>>
    %2 = arith.index_cast %arg1 : i32 to index
    %3 = memref.load %arg8[%2] : memref<4xi32, #tpu.memory_space<smem>>
    %4 = arith.muli %arg2, %3 : i32
    %c0_i32 = arith.constant 0 : i32
    return %1, %4 : i32, i32
  }
  func.func @transform_1(%arg0: i32, %arg1: i32, %arg2: i32, %arg3: memref<4xi32, #tpu.memory_space<smem>>, %arg4: memref<4xi32, #tpu.memory_space<smem>>, %arg5: memref<4xi32, #tpu.memory_space<smem>>, %arg6: memref<4xi32, #tpu.memory_space<smem>>, %arg7: memref<4xi32, #tpu.memory_space<smem>>, %arg8: memref<4xi32, #tpu.memory_space<smem>>) -> (i32, i32, i32) {
    %0 = arith.index_cast %arg1 : i32 to index
    %1 = memref.load %arg4[%0] : memref<4xi32, #tpu.memory_space<smem>>
    %2 = arith.index_cast %arg1 : i32 to index
    %3 = memref.load %arg8[%2] : memref<4xi32, #tpu.memory_space<smem>>
    %4 = arith.muli %arg2, %3 : i32
    %c0_i32 = arith.constant 0 : i32
    return %1, %4, %arg0 : i32, i32, i32
  }
  func.func @transform_2(%arg0: i32, %arg1: i32, %arg2: i32, %arg3: memref<4xi32, #tpu.memory_space<smem>>, %arg4: memref<4xi32, #tpu.memory_space<smem>>, %arg5: memref<4xi32, #tpu.memory_space<smem>>, %arg6: memref<4xi32, #tpu.memory_space<smem>>, %arg7: memref<4xi32, #tpu.memory_space<smem>>, %arg8: memref<4xi32, #tpu.memory_space<smem>>) -> (i32, i32, i32) {
    %0 = arith.index_cast %arg1 : i32 to index
    %1 = memref.load %arg4[%0] : memref<4xi32, #tpu.memory_space<smem>>
    %c0_i32 = arith.constant 0 : i32
    %c0_i32_0 = arith.constant 0 : i32
    return %1, %c0_i32, %arg0 : i32, i32, i32
  }
  func.func @transform_3(%arg0: i32, %arg1: i32, %arg2: i32, %arg3: memref<4xi32, #tpu.memory_space<smem>>, %arg4: memref<4xi32, #tpu.memory_space<smem>>, %arg5: memref<4xi32, #tpu.memory_space<smem>>, %arg6: memref<4xi32, #tpu.memory_space<smem>>, %arg7: memref<4xi32, #tpu.memory_space<smem>>, %arg8: memref<4xi32, #tpu.memory_space<smem>>) -> (i32, i32) {
    %0 = arith.index_cast %arg1 : i32 to index
    %1 = memref.load %arg3[%0] : memref<4xi32, #tpu.memory_space<smem>>
    %c0_i32 = arith.constant 0 : i32
    %c0_i32_0 = arith.constant 0 : i32
    return %1, %c0_i32 : i32, i32
  }
  func.func @transform_4(%arg0: i32, %arg1: i32, %arg2: i32, %arg3: memref<4xi32, #tpu.memory_space<smem>>, %arg4: memref<4xi32, #tpu.memory_space<smem>>, %arg5: memref<4xi32, #tpu.memory_space<smem>>, %arg6: memref<4xi32, #tpu.memory_space<smem>>, %arg7: memref<4xi32, #tpu.memory_space<smem>>, %arg8: memref<4xi32, #tpu.memory_space<smem>>) -> (i32, i32) {
    %0 = arith.index_cast %arg1 : i32 to index
    %1 = memref.load %arg3[%0] : memref<4xi32, #tpu.memory_space<smem>>
    %c0_i32 = arith.constant 0 : i32
    return %1, %arg0 : i32, i32
  }
}

</mosaic_0001>

<llo_original>
// kernel: tpu_custom_call.1
$region0: #{tpu_custom_call.1}
  #allocation0 [shape = 'u32[]', space=smem, size = 0x4, offset = 0x4, fixed_abs, tag = 'smem constant byte address 0x4 - core index']
  #allocation1 [shape = 'u32[144,128]{1,0:T(1,128)}', space=vmem, size = 0x12000, scoped, tag = 'internal scratch']
  #allocation2 [shape = 's32[32,128]{1,0:T(8,128)}', space=vmem, size = 0x4000, scoped, tag = 'scratch operand']
  #allocation3 [shape = 's32[1]{0}', space=sflag, size = 0x4, scoped, tag = 'scoped memory for tpu_custom_call.1']
  #allocation4 [shape = 'u8[512]{0}', space=smem, size = 0x200, scoped, tag = 'prefetched SMEM operand 0']
  #allocation5 [shape = 'u8[512]{0}', space=smem, size = 0x200, scoped, tag = 'prefetched SMEM operand 1']
  #allocation6 [shape = 'u8[512]{0}', space=smem, size = 0x200, scoped, tag = 'prefetched SMEM operand 2']
  #allocation7 [shape = 'u8[512]{0}', space=smem, size = 0x200, scoped, tag = 'prefetched SMEM operand 3']
  #allocation8 [shape = 'u8[512]{0}', space=smem, size = 0x200, scoped, tag = 'prefetched SMEM operand 4']
  #allocation9 [shape = 'u8[512]{0}', space=smem, size = 0x200, scoped, tag = 'prefetched SMEM operand 5']
  %s0 = inlined_call_operand.vmem [shape: s32[4], index: 0, kind: input, shape index: {}]
  %s1 = inlined_call_operand.vmem [shape: s32[4], index: 1, kind: input, shape index: {}]
  %s2 = inlined_call_operand.vmem [shape: s32[4], index: 2, kind: input, shape index: {}]
  %s3 = inlined_call_operand.vmem [shape: s32[4], index: 3, kind: input, shape index: {}]
  %s4 = inlined_call_operand.vmem [shape: s32[4], index: 4, kind: input, shape index: {}]
  %s5 = inlined_call_operand.vmem [shape: s32[4], index: 5, kind: input, shape index: {}]
  %s6 = inlined_call_operand.vmem [shape: s8[32,64], index: 6, kind: input, shape index: {}]
  %s7 = inlined_call_operand.hbm [shape: s8[4,64,128], index: 7, kind: input, shape index: {}]
  %s8 = inlined_call_operand.vmem [shape: f32[4,1,128], index: 8, kind: input, shape index: {}]
  %s9 = inlined_call_operand.vmem [shape: f32[32,1], index: 9, kind: input, shape index: {}]
  %s10 = inlined_call_operand.hbm [shape: bf16[32,128], index: 10, kind: output, shape index: {}]
  %s11 = sld [smem:[#allocation0]]
  $region81: #{tpu_custom_call.1} parent=0
    _
  %s13 = ssub.s32 1, %s11
  %s14 = scalar_select 0, %s13, %s11
  %s15 = sshll.u32 %s0, 4
  %s16 = int_to_ptr.vmem [resolvable:$true] %s15
  %18 = dma.vmem_to_smem %s16, 16, [#allocation4], [#allocation3]
  %s19 = sshll.u32 %s1, 4
  %s20 = int_to_ptr.vmem [resolvable:$true] %s19
  %22 = dma.vmem_to_smem %s20, 16, [#allocation5], [#allocation3]
  %s23 = sshll.u32 %s2, 4
  %s24 = int_to_ptr.vmem [resolvable:$true] %s23
  %26 = dma.vmem_to_smem %s24, 16, [#allocation6], [#allocation3]
  %s27 = sshll.u32 %s3, 4
  %s28 = int_to_ptr.vmem [resolvable:$true] %s27
  %30 = dma.vmem_to_smem %s28, 16, [#allocation7], [#allocation3]
  %s31 = sshll.u32 %s4, 4
  %s32 = int_to_ptr.vmem [resolvable:$true] %s31
  %34 = dma.vmem_to_smem %s32, 16, [#allocation8], [#allocation3]
  %s35 = sshll.u32 %s5, 4
  %s36 = int_to_ptr.vmem [resolvable:$true] %s35
  %38 = dma.vmem_to_smem %s36, 16, [#allocation9], [#allocation3]
  %39 = dma.done [#allocation3], 96
  %40 = sfence
  $region1: #{tpu_custom_call.1} parent=0
    #allocation10 [shape = 'u8[16384]{0}', space=vmem, size = 0x4000, scoped, tag = 'input window, operand 7']
    #allocation11 [shape = 's32[2]{0}', space=sflag, size = 0x8, scoped, tag = 'scoped memory for tpu_custom_call.1']
    #allocation12 [shape = 's32[2]{0}', space=sflag, size = 0x8, scoped, tag = 'scoped memory for tpu_custom_call.1']
    #allocation13 [shape = 'u8[16384]{0}', space=vmem, size = 0x4000, scoped, tag = 'output window, operand 0']
    %41 = vsyncpa [#allocation11], 0
    %s42 = scalar_lea.sflag [#allocation11], 1
    %43 = vsyncpa %s42, 0
    %44 = vsyncpa [#allocation12], 0
    %s45 = scalar_lea.sflag [#allocation12], 1
    %46 = vsyncpa %s45, 0
    loop: start=0, step=1, limit=6
    $region2: #{tpu_custom_call.1} parent=1 // loop_pre_header
      _
    $region3: #{tpu_custom_call.1} parent=1 // loop_header
      %s48 = sphi 0, %s52
      %p49 = scmp.ge.s32.totalorder %s48, 6
      %s55 = sphi 0, %s74
      %s56 = sphi 0, %s70
      %s57 = sphi 0, %s66
      %s58 = sphi 0, %s55
      %s59 = sphi 0, %s56
      %s60 = sphi 0, %s57
      %s61 = sphi 0, %s58
      %s62 = sphi 0, %s59
      %s63 = sphi 0, %s60
      %s85 = sphi 0, %s87
      %s88 = sphi 0, %s85
      %s89 = sphi 0, %s88
      %s105 = sphi 0, %s89
      %s121 = sphi 0, %s123
      %s124 = sphi 0, %s121
      %s125 = sphi 0, %s124
      %s141 = sphi 0, %s125
      %s151 = sphi 0, %s153
      %s154 = sphi 0, %s151
      %s155 = sphi 0, %s154
      %s171 = sphi 0, %s155
      %s179 = sphi 0, %s181
      %s182 = sphi 0, %s179
      %s183 = sphi 0, %s182
      %s199 = sphi 0, %s183
      %s209 = sphi 0, %s211
      %s212 = sphi 0, %s209
      %s213 = sphi 0, %s212
      %s229 = sphi 0, %s213
    $region4: #{tpu_custom_call.1} parent=1 // loop_header_branch
      %51 = sbr.rel (%p49) target = $region8
    $region5: #{tpu_custom_call.1} parent=1 // loop_body
      %s53 = ssub.s32 %s48, 1
      %s54 = ssub.s32 %s48, 2
      %s64 = sadd.s32 1, %s57
      %p65 = scmp.ge.s32.totalorder %s64, 1
      %s66 = scalar_select %p65, 0, %s64
      %s67 = sadd.s32 1, %s56
      %s68 = scalar_select %p65, %s67, %s56
      %p69 = scmp.ge.s32.totalorder %s68, 4
      %s70 = scalar_select %p69, 0, %s68
      %s71 = sadd.s32 1, %s55
      %s72 = scalar_select %p69, %s71, %s55
      %p73 = scmp.ge.s32.totalorder %s72, 1
      %s74 = scalar_select %p73, 0, %s72
      %s75 = sld [smem:[#allocation4 + %s56]]
      %s76 = sld [smem:[#allocation9 + %s56]]
      %s77 = smul.u32 %s57, %s76
      %s78 = sld [smem:[#allocation4 + %s70]]
      %s79 = sld [smem:[#allocation9 + %s70]]
      %s80 = smul.u32 %s66, %s79
      %s81 = ssub.s32 %s75, %s78
      %s82 = ssub.s32 %s77, %s80
      %s83 = sor.u32 %s81, %s82
      %p84 = scmp.eq.s32.totalorder %s83, 0
      %s86 = sadd.s32 %s85, 1
      %s87 = scalar_select %p84, %s85, %s86
      %p90 = pneg %p84
      %p91 = scmp.eq.s32.totalorder %s48, 3
      %p92 = por %p90, %p91
      %p93 = scmp.ne.s32.totalorder %s85, %s88
      %p94 = scmp.eq.s32.totalorder %s48, 0
      %p95 = por %p93, %p94
      %p96 = scmp.ne.s32.totalorder %s85, %s88
      %p97 = scmp.eq.s32.totalorder %s53, 3
      %p98 = por %p96, %p97
      %p99 = scmp.ne.s32.totalorder %s88, %s89
      %p100 = scmp.eq.s32.totalorder %s53, 0
      %p101 = por %p99, %p100
      %p102 = scmp.ne.s32.totalorder %s88, %s89
      %p103 = scmp.eq.s32.totalorder %s54, 3
      %p104 = por %p102, %p103
      %p106 = scmp.ne.s32.totalorder %s89, %s105
      %p107 = scmp.eq.s32.totalorder %s54, 0
      %p108 = por %p106, %p107
      %s109 = sld [smem:[#allocation5 + %s56]]
      %s110 = sld [smem:[#allocation9 + %s56]]
      %s111 = smul.u32 %s57, %s110
      %s112 = sld [smem:[#allocation5 + %s70]]
      %s113 = sld [smem:[#allocation9 + %s70]]
      %s114 = smul.u32 %s66, %s113
      %s115 = ssub.s32 %s109, %s112
      %s116 = ssub.s32 %s111, %s114
      %s117 = sor.u32 %s115, %s116
      %s118 = ssub.s32 %s55, %s74
      %s119 = sor.u32 %s117, %s118
      %p120 = scmp.eq.s32.totalorder %s119, 0
      %s122 = sadd.s32 %s121, 1
      %s123 = scalar_select %p120, %s121, %s122
      %p126 = pneg %p120
      %p127 = scmp.eq.s32.totalorder %s48, 3
      %p128 = por %p126, %p127
      %p129 = scmp.ne.s32.totalorder %s121, %s124
      %p130 = scmp.eq.s32.totalorder %s48, 0
      %p131 = por %p129, %p130
      %p132 = scmp.ne.s32.totalorder %s121, %s124
      %p133 = scmp.eq.s32.totalorder %s53, 3
      %p134 = por %p132, %p133
      %p135 = scmp.ne.s32.totalorder %s124, %s125
      %p136 = scmp.eq.s32.totalorder %s53, 0
      %p137 = por %p135, %p136
      %p138 = scmp.ne.s32.totalorder %s124, %s125
      %p139 = scmp.eq.s32.totalorder %s54, 3
      %p140 = por %p138, %p139
      %p142 = scmp.ne.s32.totalorder %s125, %s141
      %p143 = scmp.eq.s32.totalorder %s54, 0
      %p144 = por %p142, %p143
      %s145 = sld [smem:[#allocation5 + %s56]]
      %s146 = sld [smem:[#allocation5 + %s70]]
      %s147 = ssub.s32 %s145, %s146
      %s148 = ssub.s32 %s55, %s74
      %s149 = sor.u32 %s147, %s148
      %p150 = scmp.eq.s32.totalorder %s149, 0
      %s152 = sadd.s32 %s151, 1
      %s153 = scalar_select %p150, %s151, %s152
      %p156 = pneg %p150
      %p157 = scmp.eq.s32.totalorder %s48, 3
      %p158 = por %p156, %p157
      %p159 = scmp.ne.s32.totalorder %s151, %s154
      %p160 = scmp.eq.s32.totalorder %s48, 0
      %p161 = por %p159, %p160
      %p162 = scmp.ne.s32.totalorder %s151, %s154
      %p163 = scmp.eq.s32.totalorder %s53, 3
      %p164 = por %p162, %p163
      %p165 = scmp.ne.s32.totalorder %s154, %s155
      %p166 = scmp.eq.s32.totalorder %s53, 0
      %p167 = por %p165, %p166
      %p168 = scmp.ne.s32.totalorder %s154, %s155
      %p169 = scmp.eq.s32.totalorder %s54, 3
      %p170 = por %p168, %p169
      %p172 = scmp.ne.s32.totalorder %s155, %s171
      %p173 = scmp.eq.s32.totalorder %s54, 0
      %p174 = por %p172, %p173
      %s175 = sld [smem:[#allocation4 + %s56]]
      %s176 = sld [smem:[#allocation4 + %s70]]
      %s177 = ssub.s32 %s175, %s176
      %p178 = scmp.eq.s32.totalorder %s177, 0
      %s180 = sadd.s32 %s179, 1
      %s181 = scalar_select %p178, %s179, %s180
      %p184 = pneg %p178
      %p185 = scmp.eq.s32.totalorder %s48, 3
      %p186 = por %p184, %p185
      %p187 = scmp.ne.s32.totalorder %s179, %s182
      %p188 = scmp.eq.s32.totalorder %s48, 0
      %p189 = por %p187, %p188
      %p190 = scmp.ne.s32.totalorder %s179, %s182
      %p191 = scmp.eq.s32.totalorder %s53, 3
      %p192 = por %p190, %p191
      %p193 = scmp.ne.s32.totalorder %s182, %s183
      %p194 = scmp.eq.s32.totalorder %s53, 0
      %p195 = por %p193, %p194
      %p196 = scmp.ne.s32.totalorder %s182, %s183
      %p197 = scmp.eq.s32.totalorder %s54, 3
      %p198 = por %p196, %p197
      %p200 = scmp.ne.s32.totalorder %s183, %s199
      %p201 = scmp.eq.s32.totalorder %s54, 0
      %p202 = por %p200, %p201
      %s203 = sld [smem:[#allocation4 + %s56]]
      %s204 = sld [smem:[#allocation4 + %s70]]
      %s205 = ssub.s32 %s203, %s204
      %s206 = ssub.s32 %s55, %s74
      %s207 = sor.u32 %s205, %s206
      %p208 = scmp.eq.s32.totalorder %s207, 0
      %s210 = sadd.s32 %s209, 1
      %s211 = scalar_select %p208, %s209, %s210
      %p214 = pneg %p208
      %p215 = scmp.eq.s32.totalorder %s48, 3
      %p216 = por %p214, %p215
      %p217 = scmp.ne.s32.totalorder %s209, %s212
      %p218 = scmp.eq.s32.totalorder %s48, 0
      %p219 = por %p217, %p218
      %p220 = scmp.ne.s32.totalorder %s209, %s212
      %p221 = scmp.eq.s32.totalorder %s53, 3
      %p222 = por %p220, %p221
      %p223 = scmp.ne.s32.totalorder %s212, %s213
      %p224 = scmp.eq.s32.totalorder %s53, 0
      %p225 = por %p223, %p224
      %p226 = scmp.ne.s32.totalorder %s212, %s213
      %p227 = scmp.eq.s32.totalorder %s54, 3
      %p228 = por %p226, %p227
      %p230 = scmp.ne.s32.totalorder %s213, %s229
      %p231 = scmp.eq.s32.totalorder %s54, 0
      %p232 = por %p230, %p231
      %p233 = scmp.le.s32.totalorder 1, %s48
      %p234 = scmp.lt.s32.totalorder %s48, 5
      %p235 = pnand %p233, %p234
      %p236 = pneg %p235
      // Predicated region
      $region9: #{tpu_custom_call.1} parent=5 // pred_check
        _
      $region10: #{tpu_custom_call.1} parent=5 // pred_check_branch
        %238 = sbr.rel (%p235) target = $region12
      $region11: #{tpu_custom_call.1} parent=5 // pred_region
        %s239 = ssub.s32 %s48, 1
      $region12: #{tpu_custom_call.1} parent=5 // pred_fallthru
        _
      %p240 = scmp.lt.s32.totalorder %s48, 4
      // Predicated region
      $region13: #{tpu_custom_call.1} parent=5 // pred_check
        %p241 = pneg %p240
      $region14: #{tpu_custom_call.1} parent=5 // pred_check_branch
        %243 = sbr.rel (%p241) target = $region16
      $region15: #{tpu_custom_call.1} parent=5 // pred_region
        // Predicated region
        $region17: #{tpu_custom_call.1} parent=15 // pred_check
          %p244 = pneg %p95
        $region18: #{tpu_custom_call.1} parent=15 // pred_check_branch
          %246 = sbr.rel (%p244) target = $region20
        $region19: #{tpu_custom_call.1} parent=15 // pred_region
          %s247 = sld [smem:[#allocation4 + %s56]]
          %s248 = sld [smem:[#allocation9 + %s56]]
          %s249 = smul.u32 %s57, %s248
          %p250 = scmp.lt.s32.totalorder %s247, 0
          %s251 = scalar_select %p250, %s247, 0
          %p252 = scmp.lt.s32.totalorder %s249, 0
          %s253 = scalar_select %p252, %s249, 0
          %s254 = sadd.s32 %s253, %s251
          %s255 = smul.addr %s254, 8
          %s256 = scalar_lea.vmem %s6, %s255
          %s257 = sld [smem:[#allocation4 + %s56]]
          %s258 = sld [smem:[#allocation9 + %s56]]
          %s259 = smul.u32 %s57, %s258
        $region20: #{tpu_custom_call.1} parent=15 // pred_fallthru
          _
        // Predicated region
        $region21: #{tpu_custom_call.1} parent=15 // pred_check
          %p260 = pneg %p131
        $region22: #{tpu_custom_call.1} parent=15 // pred_check_branch
          %262 = sbr.rel (%p260) target = $region24
        $region23: #{tpu_custom_call.1} parent=15 // pred_region
          %s263 = sand.u32 %s121, 1
          %s264 = scalar_lea.sflag [#allocation11], %s263
          %s265 = sand.u32 %s121, 1
          %s266 = smul.addr %s265, 16
          %s267 = scalar_lea.vmem [#allocation10], %s266
          %s268 = sld [smem:[#allocation5 + %s56]]
          %s269 = sld [smem:[#allocation9 + %s56]]
          %s270 = smul.u32 %s57, %s269
          %s271 = smul.u32 2, %s270
          %s273 = ssub.s32 256, 256
          %274 = vsyncadd %s264, %s273
          %s275 = sadd.s32 %s55, %s271
          %s276 = smul.addr %s268, 2
          %s277 = sadd.s32 %s275, %s276
          %s278 = smul.addr %s277, 128
          %s279 = scalar_lea.hbm %s7, %s278
          %s280 = sshll.u32 %s267, 4
          %s281 = int_to_ptr.vmem [resolvable:$true] %s280
          %286 = dma.hbm_to_vmem [thread:$0]  %s279, 256, %s281, %s264, 128, 128, 8
        $region24: #{tpu_custom_call.1} parent=15 // pred_fallthru
          _
        // Predicated region
        $region25: #{tpu_custom_call.1} parent=15 // pred_check
          %p287 = pneg %p161
        $region26: #{tpu_custom_call.1} parent=15 // pred_check_branch
          %289 = sbr.rel (%p287) target = $region28
        $region27: #{tpu_custom_call.1} parent=15 // pred_region
          %s290 = sld [smem:[#allocation5 + %s56]]
          %p291 = scmp.lt.s32.totalorder %s290, 3
          %s292 = scalar_select %p291, %s290, 3
          %p293 = scmp.lt.s32.totalorder %s55, 0
          %s294 = scalar_select %p293, %s55, 0
          %s295 = sadd.s32 %s294, %s292
          %s296 = scalar_lea.vmem %s8, %s295
          %s297 = sld [smem:[#allocation5 + %s56]]
        $region28: #{tpu_custom_call.1} parent=15 // pred_fallthru
          _
        // Predicated region
        $region29: #{tpu_custom_call.1} parent=15 // pred_check
          %p298 = pneg %p189
        $region30: #{tpu_custom_call.1} parent=15 // pred_check_branch
          %300 = sbr.rel (%p298) target = $region32
        $region31: #{tpu_custom_call.1} parent=15 // pred_region
          %s301 = sld [smem:[#allocation4 + %s56]]
          %s302 = smul.u32 4, %s301
          %p303 = scmp.lt.s32.totalorder %s302, 3
          %s304 = scalar_select %p303, %s302, 3
          %s305 = smul.addr %s304, 8
          %s306 = scalar_lea.vmem %s9, %s305
          %s307 = sld [smem:[#allocation4 + %s56]]
          %s308 = smul.u32 4, %s307
        $region32: #{tpu_custom_call.1} parent=15 // pred_fallthru
          _
      $region16: #{tpu_custom_call.1} parent=5 // pred_fallthru
        _
      %p309 = scmp.le.s32.totalorder 1, %s48
      %p310 = scmp.lt.s32.totalorder %s48, 5
      %p311 = pnand %p309, %p310
      %p312 = pneg %p311
      // Predicated region
      $region33: #{tpu_custom_call.1} parent=5 // pred_check
        _
      $region34: #{tpu_custom_call.1} parent=5 // pred_check_branch
        %314 = sbr.rel (%p311) target = $region36
      $region35: #{tpu_custom_call.1} parent=5 // pred_region
        %s315 = ssub.s32 %s48, 1
        %s316 = sand.u32 %s124, 1
        %s317 = scalar_lea.sflag [#allocation11], %s316
        %s318 = sand.u32 %s124, 1
        %s319 = smul.addr %s318, 16
        %s320 = scalar_lea.vmem [#allocation10], %s319
        // Predicated region
        $region37: #{tpu_custom_call.1} parent=35 // pred_check
          %p321 = pneg %p137
        $region38: #{tpu_custom_call.1} parent=35 // pred_check_branch
          %323 = sbr.rel (%p321) target = $region40
        $region39: #{tpu_custom_call.1} parent=35 // pred_region
          %324 = dma.done %s317, 256
        $region40: #{tpu_custom_call.1} parent=35 // pred_fallthru
          _
        %s325 = sld [smem:[#allocation4 + %s59]]
        %s326 = sld [smem:[#allocation9 + %s59]]
        %s327 = smul.u32 %s60, %s326
        %p328 = scmp.lt.s32.totalorder %s325, 0
        %s329 = scalar_select %p328, %s325, 0
        %p330 = scmp.lt.s32.totalorder %s327, 0
        %s331 = scalar_select %p330, %s327, 0
        %s332 = sadd.s32 %s331, %s329
        %s333 = smul.addr %s332, 8
        %s334 = scalar_lea.vmem %s6, %s333
        %p335 = pneg %p101
        %p336 = pneg %p98
        %s337 = sand.u32 %s124, 1
        %s338 = scalar_lea.sflag [#allocation11], %s337
        %s339 = sand.u32 %s124, 1
        %s340 = smul.addr %s339, 16
        %s341 = scalar_lea.vmem [#allocation10], %s340
        %p342 = pneg %p137
        %p343 = pneg %p134
        %s344 = sld [smem:[#allocation5 + %s59]]
        %p345 = scmp.lt.s32.totalorder %s344, 3
        %s346 = scalar_select %p345, %s344, 3
        %p347 = scmp.lt.s32.totalorder %s58, 0
        %s348 = scalar_select %p347, %s58, 0
        %s349 = sadd.s32 %s348, %s346
        %s350 = scalar_lea.vmem %s8, %s349
        %p351 = pneg %p167
        %p352 = pneg %p164
        %s353 = sld [smem:[#allocation4 + %s59]]
        %s354 = smul.u32 4, %s353
        %p355 = scmp.lt.s32.totalorder %s354, 3
        %s356 = scalar_select %p355, %s354, 3
        %s357 = smul.addr %s356, 8
        %s358 = scalar_lea.vmem %s9, %s357
        %p359 = pneg %p195
        %p360 = pneg %p192
        %p361 = pneg %p225
        %p362 = pneg %p222
        %s363 = sand.u32 %s212, 1
        %s364 = scalar_lea.sflag [#allocation12], %s363
        %s365 = sand.u32 %s212, 1
        %s366 = smul.addr %s365, 16
        %s367 = scalar_lea.vmem [#allocation13], %s366
        %s368 = sld [smem:[#allocation4 + %s59]]
        %s369 = sld [smem:[#allocation9 + %s59]]
        %s370 = smul.u32 %s60, %s369
        %p371 = scmp.lt.s32.totalorder %s368, 0
        %s372 = scalar_select %p371, %s368, 0
        %p373 = scmp.lt.s32.totalorder %s370, 0
        %s374 = scalar_select %p373, %s370, 0
        %s375 = sadd.s32 %s374, %s372
        %s376 = smul.addr %s375, 8
        %s377 = scalar_lea.vmem %s6, %s376
        %s378 = sld [smem:[#allocation4 + %s59]]
        %s379 = sld [smem:[#allocation9 + %s59]]
        %s380 = smul.u32 %s60, %s379
        %s381 = sld [smem:[#allocation5 + %s59]]
        %s382 = sld [smem:[#allocation9 + %s59]]
        %s383 = smul.u32 %s60, %s382
        %s384 = smul.u32 2, %s383
        %s385 = sld [smem:[#allocation5 + %s59]]
        %p386 = scmp.lt.s32.totalorder %s385, 3
        %s387 = scalar_select %p386, %s385, 3
        %p388 = scmp.lt.s32.totalorder %s58, 0
        %s389 = scalar_select %p388, %s58, 0
        %s390 = sadd.s32 %s389, %s387
        %s391 = scalar_lea.vmem %s8, %s390
        %s392 = sld [smem:[#allocation5 + %s59]]
        %s393 = sld [smem:[#allocation4 + %s59]]
        %s394 = smul.u32 4, %s393
        %p395 = scmp.lt.s32.totalorder %s394, 3
        %s396 = scalar_select %p395, %s394, 3
        %s397 = smul.addr %s396, 8
        %s398 = scalar_lea.vmem %s9, %s397
        %s399 = sld [smem:[#allocation4 + %s59]]
        %s400 = smul.u32 4, %s399
        %s401 = sld [smem:[#allocation4 + %s59]]
        %s402 = smul.u32 4, %s401
        %s406 = sld [smem:[#allocation6 + %s59]]
        %s407 = sld [smem:[#allocation7 + %s59]]
        %p408 = scmp.eq.s32.totalorder %s60, 0
        // Predicated region
        $region41: #{tpu_custom_call.1} parent=35 // pred_check
          %p409 = pneg %p408
        $region42: #{tpu_custom_call.1} parent=35 // pred_check_branch
          %411 = sbr.rel (%p409) target = $region44
        $region43: #{tpu_custom_call.1} parent=35 // pred_region
          %412 = vst [vmem:[#allocation2] sm:$0xff] 0
          %413 = vst [vmem:[#allocation2 + $0x8] sm:$0xff] 0
          %414 = vst [vmem:[#allocation2 + $0x10] sm:$0xff] 0
          %415 = vst [vmem:[#allocation2 + $0x18] sm:$0xff] 0
        $region44: #{tpu_custom_call.1} parent=35 // pred_fallthru
          _
        %p416 = scmp.gt.s32.totalorder %s407, %s406
        // Predicated region
        $region45: #{tpu_custom_call.1} parent=35 // pred_check
          %p417 = pneg %p416
        $region46: #{tpu_custom_call.1} parent=35 // pred_check_branch
          %419 = sbr.rel (%p417) target = $region48
        $region47: #{tpu_custom_call.1} parent=35 // pred_region
          %v420 = vld [vmem:[#allocation2] sm:$0xff]
          %v421 = vld [vmem:[#allocation2 + $0x8] sm:$0xff]
          %v422 = vld [vmem:[#allocation2 + $0x10] sm:$0xff]
          %v423 = vld [vmem:[#allocation2 + $0x18] sm:$0xff]
          %v424 = vld [vmem:[%s377] sm:$0xff]
          %v425 = vld [vmem:[%s320] sm:$0xff]
          %v426 = vld [vmem:[%s320 + $0x8] sm:$0xff]
          %vm427 = vcmask 523264
          %v429 = vsel %vm427, %v424, 0
          %431 = vmatprep.subr.s8.mxu0 0
          %432 = vmatpush1.s8.msra.mxu0 0
          %433 = vmatprep.subr.s8.mxu0 0
          %434 = vmatpush1.s8.msra.mxu0 0
          %435 = vmatprep.subr.s8.mxu0 0
          %436 = vmatpush1.s8.msra.mxu0 %v426
          %437 = vmatprep.subr.s8.mxu0 0
          %438 = vmatpush1.s8.msra.mxu0 %v425
          %439 = vmatprep.subr.s8.mxu0 0
          %440 = vmatpush2.s8.msra.mxu0 0
          %441 = vmatprep.subr.s8.mxu0 0
          %442 = vmatpush2.s8.msra.mxu0 0
          %443 = vmatprep.subr.s8.mxu0 0
          %444 = vmatpush2.s8.msra.mxu0 0
          %445 = vmatprep.subr.s8.mxu0 0
          %446 = vmatpush2.s8.msra.mxu0 0
          %447 = vmatprep.mubr.s8.mxu0 0
          %448 = vmatmul.mubr.s8.gmra.mxu0 %v429
          %v449 = vpop.s32.mrf.mxu0
          %v450 = vadd.s32 0, %v449
          %v451 = vpop.s32.mrf.mxu0
          %v452 = vpop.s32.mrf.mxu0
          %v453 = vadd.s32 0, %v452
          %v454 = vpop.s32.mrf.mxu0
          %v455 = vpop.s32.mrf.mxu0
          %v456 = vadd.s32 0, %v455
          %v457 = vpop.s32.mrf.mxu0
          %v458 = vpop.s32.mrf.mxu0
          %v459 = vadd.s32 0, %v458
          %v460 = vpop.s32.mrf.mxu0
          %461 = vdwg.mxu0
          %v462 = vadd.s32 %v420, %v450
          %v463 = vadd.s32 %v421, %v453
          %v464 = vadd.s32 %v422, %v456
          %v465 = vadd.s32 %v423, %v459
          %466 = vst [vmem:[#allocation2] sm:$0xff] %v462
          %467 = vst [vmem:[#allocation2 + $0x8] sm:$0xff] %v463
          %468 = vst [vmem:[#allocation2 + $0x10] sm:$0xff] %v464
          %469 = vst [vmem:[#allocation2 + $0x18] sm:$0xff] %v465
        $region48: #{tpu_custom_call.1} parent=35 // pred_fallthru
          _
        %s470 = sld [smem:[#allocation9 + %s59]]
        %p471 = scmp.eq.s32.totalorder %s470, 1
        %p472 = pnand %p408, %p471
        %p473 = pneg %p472
        // Predicated region
        $region49: #{tpu_custom_call.1} parent=35 // pred_check
          _
        $region50: #{tpu_custom_call.1} parent=35 // pred_check_branch
          %475 = sbr.rel (%p472) target = $region52
        $region51: #{tpu_custom_call.1} parent=35 // pred_region
          %v476 = vld [vmem:[#allocation2] sm:$0xff]
          %v477 = vld [vmem:[#allocation2 + $0x8] sm:$0xff]
          %v478 = vld [vmem:[#allocation2 + $0x10] sm:$0xff]
          %v479 = vld [vmem:[#allocation2 + $0x18] sm:$0xff]
          %v480 = vcvt.s32.f32 %v476
          %v481 = vcvt.s32.f32 %v477
          %v482 = vcvt.s32.f32 %v478
          %v483 = vcvt.s32.f32 %v479
          %v484 = vld [vmem:[%s391] sm:$0x1]
          %v486 = vlaneseq
          %v487 = vshrl.u32 %v486, 7
          %v488 = vsub.s32 0, %v487
          %v489 = vrot.slane %v484, %v488
          %v491 = vmul.f32 %v480, %v489
          %v492 = vmul.f32 %v481, %v489
          %v493 = vmul.f32 %v482, %v489
          %v494 = vmul.f32 %v483, %v489
          %v495 = vld [vmem:[%s398] sm:$0xff]
          %v496 = vld [vmem:[%s398 + $0x8] sm:$0xff]
          %v497 = vld [vmem:[%s398 + $0x10] sm:$0xff]
          %v498 = vld [vmem:[%s398 + $0x18] sm:$0xff]
          %500 = vset.pattern.permute.xlu0 0
          %501 = vperm.xlu0 %500, %v495
          %v502 = vpop.permute.xlu0 %501
          %505 = vset.pattern.permute.xlu0 0
          %506 = vperm.xlu0 %505, %v496
          %v507 = vpop.permute.xlu0 %506
          %510 = vset.pattern.permute.xlu0 0
          %511 = vperm.xlu0 %510, %v497
          %v512 = vpop.permute.xlu0 %511
          %515 = vset.pattern.permute.xlu0 0
          %516 = vperm.xlu0 %515, %v498
          %v517 = vpop.permute.xlu0 %516
          %v519 = vmul.f32 %v491, %v502
          %v520 = vmul.f32 %v492, %v507
          %v521 = vmul.f32 %v493, %v512
          %v522 = vmul.f32 %v494, %v517
          %s523 = sld [smem:[#allocation8 + %s59]]
          %p524 = scmp.eq.s32.totalorder %s523, 1
          %p525 = scmp.eq.s32.totalorder %s406, 0
          %p526 = scmp.eq.s32.totalorder %s407, 32
          %p527 = pnand %p525, %p526
          %p528 = pneg %p527
          %p529 = pnand %p524, %p528
          %p530 = pneg %p529
          // Predicated region
          $region53: #{tpu_custom_call.1} parent=51 // pred_check
            _
          $region54: #{tpu_custom_call.1} parent=51 // pred_check_branch
            %532 = sbr.rel (%p529) target = $region56
          $region55: #{tpu_custom_call.1} parent=51 // pred_region
            %v533 = vpack.c.bf16 %v520, %v519
            %v534 = vpack.c.bf16 %v522, %v521
            %v537 = vunpack.c.l.b16 %v533
            %v538 = vunpack.c.h.b16 %v533
            %v539 = vunpack.c.l.b16 %v534
            %v540 = vunpack.c.h.b16 %v534
            %v541 = vpack.c.b16 %v537, %v537
            %v542 = vpack.c.b16 %v538, %v538
            %v543 = vpack.c.b16 %v539, %v539
            %v544 = vpack.c.b16 %v540, %v540
            %549 = vst [vmem:[%s367] sm:$0xf] %v541
            %550 = vst [vmem:[%s367 + $0x4] sm:$0xf] %v542
            %551 = vst [vmem:[%s367 + $0x8] sm:$0xf] %v543
            %552 = vst [vmem:[%s367 + $0xc] sm:$0xf] %v544
          $region56: #{tpu_custom_call.1} parent=51 // pred_fallthru
            _
          %p553 = pneg %p530
          // Predicated region
          $region57: #{tpu_custom_call.1} parent=51 // pred_check
            _
          $region58: #{tpu_custom_call.1} parent=51 // pred_check_branch
            %555 = sbr.rel (%p530) target = $region60
          $region59: #{tpu_custom_call.1} parent=51 // pred_region
            %v556 = vlaneseq
            %v557 = vshrl.u32 %v556, 7
            %v558 = vadd.s32 %v557, 8
            %v559 = vadd.s32 %v557, 16
            %v560 = vadd.s32 %v557, 24
            %v561 = vstv %s406
            %vm562 = vcmp.ge.s32.totalorder %v557, %v561
            %vm563 = vcmp.ge.s32.totalorder %v558, %v561
            %vm564 = vcmp.ge.s32.totalorder %v559, %v561
            %vm565 = vcmp.ge.s32.totalorder %v560, %v561
            %v566 = vstv %s407
            %vm567 = vcmp.lt.s32.totalorder %v557, %v566
            %vm568 = vcmp.lt.s32.totalorder %v558, %v566
            %vm569 = vcmp.lt.s32.totalorder %v559, %v566
            %vm570 = vcmp.lt.s32.totalorder %v560, %v566
            %vm571 = vmand %vm562, %vm567
            %vm572 = vmand %vm563, %vm568
            %vm573 = vmand %vm564, %vm569
            %vm574 = vmand %vm565, %vm570
            // Predicated region
            $region61: #{tpu_custom_call.1} parent=59 // pred_check
              %p575 = pneg %p524
            $region62: #{tpu_custom_call.1} parent=59 // pred_check_branch
              %577 = sbr.rel (%p575) target = $region64
            $region63: #{tpu_custom_call.1} parent=59 // pred_region
              %v578 = vsel %vm571, 1, 0
              %v579 = vsel %vm572, 1, 0
              %v580 = vsel %vm573, 1, 0
              %v581 = vsel %vm574, 1, 0
              %vm582 = vcmp.eq.s32.totalorder %v578, 1
              %vm583 = vcmp.eq.s32.totalorder %v579, 1
              %vm584 = vcmp.eq.s32.totalorder %v580, 1
              %vm585 = vcmp.eq.s32.totalorder %v581, 1
              %v586 = vsel %vm582, %v519, 0.0
              %v587 = vsel %vm583, %v520, 0.0
              %v588 = vsel %vm584, %v521, 0.0
              %v589 = vsel %vm585, %v522, 0.0
              %v590 = vpack.c.bf16 %v587, %v586
              %v591 = vpack.c.bf16 %v589, %v588
              %v594 = vunpack.c.l.b16 %v590
              %v595 = vunpack.c.h.b16 %v590
              %v596 = vunpack.c.l.b16 %v591
              %v597 = vunpack.c.h.b16 %v591
              %v598 = vpack.c.b16 %v594, %v594
              %v599 = vpack.c.b16 %v595, %v595
              %v600 = vpack.c.b16 %v596, %v596
              %v601 = vpack.c.b16 %v597, %v597
              %606 = vst [vmem:[%s367] sm:$0xf] %v598
              %607 = vst [vmem:[%s367 + $0x4] sm:$0xf] %v599
              %608 = vst [vmem:[%s367 + $0x8] sm:$0xf] %v600
              %609 = vst [vmem:[%s367 + $0xc] sm:$0xf] %v601
            $region64: #{tpu_custom_call.1} parent=59 // pred_fallthru
              _
            %p610 = scmp.eq.s32.totalorder %s523, 0
            // Predicated region
            $region65: #{tpu_custom_call.1} parent=59 // pred_check
              %p611 = pneg %p610
            $region66: #{tpu_custom_call.1} parent=59 // pred_check_branch
              %613 = sbr.rel (%p611) target = $region68
            $region67: #{tpu_custom_call.1} parent=59 // pred_region
              %v614 = vpack.c.bf16 %v520, %v519
              %v615 = vpack.c.bf16 %v522, %v521
              %v616 = vld [vmem:[%s367] sm:$0xf]
              %v617 = vld [vmem:[%s367 + $0x4] sm:$0xf]
              %v618 = vld [vmem:[%s367 + $0x8] sm:$0xf]
              %v619 = vld [vmem:[%s367 + $0xc] sm:$0xf]
              %v620 = vsel %vm571, 1, 0
              %v621 = vsel %vm572, 1, 0
              %v622 = vsel %vm573, 1, 0
              %v623 = vsel %vm574, 1, 0
              %vm624 = vcmp.eq.s32.totalorder %v620, 1
              %vm625 = vcmp.eq.s32.totalorder %v621, 1
              %vm626 = vcmp.eq.s32.totalorder %v622, 1
              %vm627 = vcmp.eq.s32.totalorder %v623, 1
              %vm628 = vmpackc.low %vm624, %vm624
              %vm629 = vmpackc.low %vm625, %vm625
              %vm630 = vmpackc.low %vm626, %vm626
              %vm631 = vmpackc.low %vm627, %vm627
              %v632 = vsel %vm628, 65537, 0
              %v633 = vsel %vm629, 65537, 0
              %v634 = vsel %vm630, 65537, 0
              %v635 = vsel %vm631, 65537, 0
              %v636 = vunpack.c.l.b16 %v632
              %v637 = vunpack.c.l.b16 %v633
              %v638 = vunpack.c.l.b16 %v634
              %v639 = vunpack.c.l.b16 %v635
              %v640 = vpack.c.b16 %v637, %v636
              %v641 = vpack.c.b16 %v639, %v638
              %vm642 = vcmp.ne.s16.totalorder %v640, 0
              %vm643 = vcmp.ne.s16.totalorder %v641, 0
              %v648 = vunpack.c.l.b16 %v616
              %v649 = vunpack.c.l.b16 %v617
              %v650 = vunpack.c.l.b16 %v618
              %v651 = vunpack.c.l.b16 %v619
              %v652 = vpack.c.b16 %v649, %v648
              %v653 = vpack.c.b16 %v651, %v650
              %v656 = vsel %vm642, %v614, %v652
              %v657 = vsel %vm643, %v615, %v653
              %v660 = vunpack.c.l.b16 %v656
              %v661 = vunpack.c.h.b16 %v656
              %v662 = vunpack.c.l.b16 %v657
              %v663 = vunpack.c.h.b16 %v657
              %v664 = vpack.c.b16 %v660, %v660
              %v665 = vpack.c.b16 %v661, %v661
              %v666 = vpack.c.b16 %v662, %v662
              %v667 = vpack.c.b16 %v663, %v663
              %672 = vst [vmem:[%s367] sm:$0xf] %v664
              %673 = vst [vmem:[%s367 + $0x4] sm:$0xf] %v665
              %674 = vst [vmem:[%s367 + $0x8] sm:$0xf] %v666
              %675 = vst [vmem:[%s367 + $0xc] sm:$0xf] %v667
            $region68: #{tpu_custom_call.1} parent=59 // pred_fallthru
              _
          $region60: #{tpu_custom_call.1} parent=51 // pred_fallthru
            _
        $region52: #{tpu_custom_call.1} parent=35 // pred_fallthru
          _
        %s676 = sand.u32 %s212, 1
        %s677 = scalar_lea.sflag [#allocation12], %s676
        %s678 = sand.u32 %s212, 1
        %s679 = smul.addr %s678, 16
        %s680 = scalar_lea.vmem [#allocation13], %s679
        // Predicated region
        $region69: #{tpu_custom_call.1} parent=35 // pred_check
          %p681 = pneg %p222
        $region70: #{tpu_custom_call.1} parent=35 // pred_check_branch
          %683 = sbr.rel (%p681) target = $region72
        $region71: #{tpu_custom_call.1} parent=35 // pred_region
          %s684 = sld [smem:[#allocation4 + %s59]]
          %s685 = smul.u32 4, %s684
          %s687 = ssub.s32 256, 256
          %688 = vsyncadd %s677, %s687
          %s689 = sadd.s32 %s58, %s685
          %s690 = smul.addr %s689, 64
          %s691 = scalar_lea.hbm %s10, %s690
          %s692 = sshll.u32 %s680, 4
          %s693 = int_to_ptr.vmem [resolvable:$true] %s692
          %698 = dma.vmem_to_hbm [thread:$0]  %s693, 256, %s691, %s677, 64, 64, 4
        $region72: #{tpu_custom_call.1} parent=35 // pred_fallthru
          _
      $region36: #{tpu_custom_call.1} parent=5 // pred_fallthru
        _
      %p699 = scmp.le.s32.totalorder 2, %s48
      // Predicated region
      $region73: #{tpu_custom_call.1} parent=5 // pred_check
        %p700 = pneg %p699
      $region74: #{tpu_custom_call.1} parent=5 // pred_check_branch
        %702 = sbr.rel (%p700) target = $region76
      $region75: #{tpu_custom_call.1} parent=5 // pred_region
        %s703 = ssub.s32 %s48, 2
        // Predicated region
        $region77: #{tpu_custom_call.1} parent=75 // pred_check
          %p704 = pneg %p228
        $region78: #{tpu_custom_call.1} parent=75 // pred_check_branch
          %706 = sbr.rel (%p704) target = $region80
        $region79: #{tpu_custom_call.1} parent=75 // pred_region
          %s707 = sand.u32 %s213, 1
          %s708 = scalar_lea.sflag [#allocation12], %s707
          %s709 = sand.u32 %s213, 1
          %s710 = smul.addr %s709, 16
          %s711 = scalar_lea.vmem [#allocation13], %s710
          %712 = dma.done %s708, 256
        $region80: #{tpu_custom_call.1} parent=75 // pred_fallthru
          _
      $region76: #{tpu_custom_call.1} parent=5 // pred_fallthru
        _
    $region6: #{tpu_custom_call.1} parent=1 // loop_footer
      %s52 = sadd.s32 1, %s48
    $region7: #{tpu_custom_call.1} parent=1 // loop_footer_branch
      %47 = sbr.rel target = $region3
    $region8: #{tpu_custom_call.1} parent=1 // loop_exit
      _
    %713 = vsyncpa [#allocation11], 1
    %s714 = scalar_lea.sflag [#allocation11], 1
    %715 = vsyncpa %s714, 1
    %716 = vsyncpa [#allocation12], 1
    %s717 = scalar_lea.sflag [#allocation12], 1
    %718 = vsyncpa %s717, 1

</llo_original>
